<compile_context>
chip_gen: v5e
topology: v5e:2x2
jax: 0.10.0
libtpu: 0.0.40
codegen_flags: <defaults>
</compile_context>

<pallas_src>
import functools

import jax
import jax.numpy as jnp
from jax.experimental import pallas as pl
from jax.experimental.pallas import tpu as pltpu


# ----------------------------------------------------------------------------- utils
def _round_up(x, m):
    return ((x + m - 1) // m) * m


def _sublane_multiple(dtype):
    # Sub-32-bit dtypes pack along sublanes: f32 -> 8, bf16 -> 16, int8/fp8 -> 32.
    return max(8, 32 // jnp.dtype(dtype).itemsize)


def _padded_block_bytes(shape, dtype):
    """VMEM footprint of ONE buffer of a 2-D block, with (sublane, lane) padding."""
    r, c = shape
    r = _round_up(r, _sublane_multiple(dtype))
    c = _round_up(c, 128)
    return r * c * jnp.dtype(dtype).itemsize


def _vmem_cap_bytes():
    """Conservative cap for vmem_limit_bytes: <= half of physical VMEM, <= 48 MiB."""
    try:
        phys = pltpu.get_tpu_info().vmem_capacity_bytes
    except Exception:  # info query unavailable -> assume the smallest part (v7x, 64 MiB)
        phys = 64 << 20
    return min(phys // 2, 48 << 20)


def _clamp_tile(tile, min_tile, footprint_fn, cap):
    """Halve the tile (keeping alignment) until the padded double-buffered
    footprint fits under the VMEM cap."""
    while tile > min_tile and footprint_fn(tile) > cap:
        tile = max(min_tile, _round_up(tile // 2, min_tile))
    return tile


def _dim_semantics(core_parallel):
    if core_parallel:
        cp = getattr(pltpu, "CORE_PARALLEL", None)
        if cp is not None:
            return (cp,)
    return ("parallel",)


# --------------------------------------------------------------------------- kernels
def _smear_kernel_gn(dist_ref, out_ref, *, coeff, start, delta, num_gaussians):
    """Lane-dense layout: dist_ref (1, TN), out_ref (G, TN)."""
    g = jax.lax.broadcasted_iota(jnp.int32, (num_gaussians, 1), 0).astype(jnp.float32)
    offset = start + delta * g                  # (G, 1) compile-time-constant vreg
    d = dist_ref[...] - offset                  # (1,TN) - (G,1) -> (G,TN), sublane bcast
    out_ref[...] = jnp.exp(coeff * d * d).astype(out_ref.dtype)


def _smear_kernel_ng(dist_ref, out_ref, *, coeff, start, delta, num_gaussians):
    """Module-contract layout: dist_ref (TN, 1), out_ref (TN, G)."""
    g = jax.lax.broadcasted_iota(jnp.int32, (1, num_gaussians), 1).astype(jnp.float32)
    offset = start + delta * g                  # (1, G) constant
    d = dist_ref[...] - offset                  # (TN,1) - (1,G) -> (TN,G)
    out_ref[...] = jnp.exp(coeff * d * d).astype(out_ref.dtype)


def _smear_embed_kernel_gn(dist_ref, wt_ref, b_ref, out_ref, *,
                           coeff, start, delta, num_gaussians):
    """Fused smearing + edge-embedding Linear.

    dist_ref (1, TN), wt_ref (H, G) = weight.T, b_ref (H, 1), out_ref (H, TN).
    The (G, TN) smeared tile lives only in vregs/VMEM -- never written to HBM.
    """
    g = jax.lax.broadcasted_iota(jnp.int32, (num_gaussians, 1), 0).astype(jnp.float32)
    offset = start + delta * g
    d = dist_ref[...] - offset
    smeared = jnp.exp(coeff * d * d)                                   # (G, TN) f32
    acc = jnp.dot(wt_ref[...], smeared,
                  preferred_element_type=jnp.float32)                  # (H, TN) on MXU
    out_ref[...] = (acc + b_ref[...]).astype(out_ref.dtype)


# -------------------------------------------------------------------------- wrappers
def gaussian_smearing(dist, start=0.0, stop=5.0, num_gaussians=50,
                      tile_n=None, layout="gn", out_dtype=jnp.float32,
                      core_parallel=False):
    """Pallas implementation of GaussianSmearing.forward.

    layout="gn" (default, hot path): output is (num_gaussians, N) -- lane-dense
      unmasked stores, tiny contiguous input blocks.  This is the transpose of the
      PyTorch module's output; use it when the consumer can take that layout
      (e.g. the fused edge embedding below).
    layout="ng": output is (N, num_gaussians), exactly the module's contract.
      Slower path (G=50 < 128 lanes -> masked stores, 128x lane-padded input).

    out_dtype: math is always f32; cast happens only at the store (bf16 halves
      the HBM writeback, which is what this kernel is bound on).
    core_parallel: set True on v7x to shard the grid axis across both TensorCores.
    """
    assert num_gaussians >= 2, "num_gaussians must be >= 2"
    delta = float(stop - start) / (num_gaussians - 1)
    coeff = -0.5 / (delta ** 2)

    flat = jnp.reshape(dist, (-1,))
    if flat.dtype != jnp.float32:
        flat = flat.astype(jnp.float32)
    n = flat.shape[0]

    cap = _vmem_cap_bytes()

    if layout == "gn":
        if tile_n is None:
            tile_n = 16384            # ~8 MiB padded double-buffered footprint (f32)
        assert tile_n % 128 == 0, "tile_n must be a multiple of 128 for layout='gn'"
        min_tile = 128
        tile = min(tile_n, _round_up(n, 128))

        def blocks(t):
            return (1, t), (num_gaussians, t)

    elif layout == "ng":
        sub = _sublane_multiple(out_dtype)       # 8 for f32, 16 for bf16
        if tile_n is None:
            tile_n = 2048
        tile_n = _round_up(tile_n, sub)
        min_tile = sub
        tile = min(tile_n, _round_up(n, sub))

        def blocks(t):
            return (t, 1), (t, num_gaussians)

    else:
        raise ValueError(f"unknown layout: {layout!r}")

    def footprint(t):
        ib, ob = blocks(t)
        # double-buffered input + output, PADDED shapes
        return 2 * (_padded_block_bytes(ib, jnp.float32)
                    + _padded_block_bytes(ob, out_dtype))

    tile = _clamp_tile(tile, min_tile, footprint, cap)
    in_block, out_block = blocks(tile)
    grid = (pl.cdiv(n, tile),)

    kernel_fn = _smear_kernel_gn if layout == "gn" else _smear_kernel_ng
    kernel = functools.partial(kernel_fn, coeff=coeff, start=start,
                               delta=delta, num_gaussians=num_gaussians)

    if layout == "gn":
        in_specs = [pl.BlockSpec(in_block, lambda i: (0, i))]
        out_specs = pl.BlockSpec(out_block, lambda i: (0, i))
        out_shape = jax.ShapeDtypeStruct((num_gaussians, n), out_dtype)
        operand = flat.reshape(1, n)
    else:
        in_specs = [pl.BlockSpec(in_block, lambda i: (i, 0))]
        out_specs = pl.BlockSpec(out_block, lambda i: (i, 0))
        out_shape = jax.ShapeDtypeStruct((n, num_gaussians), out_dtype)
        operand = flat.reshape(n, 1)

    compiler_kwargs = dict(dimension_semantics=_dim_semantics(core_parallel))
    vmem_need = footprint(tile)
    if vmem_need > 12 * 1024 * 1024:
        compiler_kwargs["vmem_limit_bytes"] = int(min(vmem_need + (4 << 20), cap))

    return pl.pallas_call(
        kernel,
        out_shape=out_shape,
        grid_spec=pltpu.PrefetchScalarGridSpec(
            num_scalar_prefetch=0,
            grid=grid,
            in_specs=in_specs,
            out_specs=out_specs,
        ),
        compiler_params=pltpu.CompilerParams(**compiler_kwargs),
    )(operand)


def gaussian_smearing_edge_embed(dist, weight, bias, start=0.0, stop=5.0,
                                 tile_n=16384, out_dtype=jnp.float32,
                                 core_parallel=False):
    """Fused GaussianSmearing + edge-embedding Linear (GATv2 lin_edge, G -> H).

    Semantically:  out == (exp(coeff*(dist[:,None]-offset)**2) @ weight + bias).T
    i.e. output is (H, N), lane-dense; the intermediate (N, G) tensor never touches
    HBM.  weight: (num_gaussians, H), bias: (H,).
    """
    num_gaussians, hidden = weight.shape
    assert num_gaussians >= 2, "num_gaussians must be >= 2"
    delta = float(stop - start) / (num_gaussians - 1)
    coeff = -0.5 / (delta ** 2)

    flat = jnp.reshape(dist, (-1,)).astype(jnp.float32)
    n = flat.shape[0]
    wt = jnp.asarray(weight, jnp.float32).T                  # (H, G)
    b2 = jnp.asarray(bias, jnp.float32).reshape(hidden, 1)   # (H, 1)

    cap = _vmem_cap_bytes()
    assert tile_n % 128 == 0, "tile_n must be a multiple of 128"
    tile = min(tile_n, _round_up(n, 128))

    def footprint(t):
        return 2 * (_padded_block_bytes((1, t), jnp.float32)
                    + _padded_block_bytes((hidden, num_gaussians), jnp.float32)
                    + _padded_block_bytes((hidden, 1), jnp.float32)
                    + _padded_block_bytes((hidden, t), out_dtype))

    tile = _clamp_tile(tile, 128, footprint, cap)
    grid = (pl.cdiv(n, tile),)

    kernel = functools.partial(_smear_embed_kernel_gn, coeff=coeff, start=start,
                               delta=delta, num_gaussians=num_gaussians)

    compiler_kwargs = dict(dimension_semantics=_dim_semantics(core_parallel))
    vmem_need = footprint(tile)
    if vmem_need > 12 * 1024 * 1024:
        compiler_kwargs["vmem_limit_bytes"] = int(min(vmem_need + (4 << 20), cap))

    return pl.pallas_call(
        kernel,
        out_shape=jax.ShapeDtypeStruct((hidden, n), out_dtype),
        grid_spec=pltpu.PrefetchScalarGridSpec(
            num_scalar_prefetch=0,
            grid=grid,
            in_specs=[
                pl.BlockSpec((1, tile), lambda i: (0, i)),                  # distances
                pl.BlockSpec((hidden, num_gaussians), lambda i: (0, 0)),    # weight.T
                pl.BlockSpec((hidden, 1), lambda i: (0, 0)),                # bias
            ],
            out_specs=pl.BlockSpec((hidden, tile), lambda i: (0, i)),
        ),
        compiler_params=pltpu.CompilerParams(**compiler_kwargs),
    )(flat.reshape(1, n), wt, b2)


# ------------------------------------------------------------------------- reference
def _reference(dist, start=0.0, stop=5.0, num_gaussians=50):
    offset = jnp.linspace(start, stop, num_gaussians, dtype=jnp.float32)
    delta = float(stop - start) / (num_gaussians - 1)
    coeff = -0.5 / (delta ** 2)
    d = jnp.reshape(dist, (-1, 1)).astype(jnp.float32) - offset.reshape(1, -1)
    return jnp.exp(coeff * d * d)


if __name__ == "__main__":
    key = jax.random.PRNGKey(0)
    k0, k1, k2, k3 = jax.random.split(key, 4)

    # Edge distances as EnergyForceGraphAttention would produce them (E edges, col
    # vector); E is deliberately not tile/128-aligned to exercise ragged masking.
    n_edges = 200
    dist = jax.random.uniform(k0, (n_edges, 1), dtype=jnp.float32, minval=0.0, maxval=5.0)
    ref = _reference(dist)

    # Default lane-dense layout: output (G, N) == module output transposed.
    out_gn = jax.block_until_ready(gaussian_smearing(dist))
    assert out_gn.shape == (50, n_edges), out_gn.shape
    assert jnp.allclose(out_gn, ref.T, atol=1e-5, rtol=1e-5), "mismatch (gn, default)"

    # Module-contract layout (N, G), exactly GaussianSmearing.forward.
    out_ng = jax.block_until_ready(gaussian_smearing(dist, layout="ng"))
    assert out_ng.shape == (n_edges, 50), out_ng.shape
    assert jnp.allclose(out_ng, ref, atol=1e-5, rtol=1e-5), "mismatch (ng)"

    # Multi-block ragged edge, gn layout (tile smaller than N, N not tile-multiple).
    n2 = 1000
    dist2 = jax.random.uniform(k1, (n2,), dtype=jnp.float32, minval=0.0, maxval=5.0)
    ref2 = _reference(dist2)
    out2 = jax.block_until_ready(gaussian_smearing(dist2, tile_n=256))
    assert out2.shape == (50, n2), out2.shape
    assert jnp.allclose(out2, ref2.T, atol=1e-5, rtol=1e-5), "mismatch (gn, ragged)"

    # bf16 writeback (math stays f32, cast only at the store).
    out_bf16 = jax.block_until_ready(gaussian_smearing(dist2, out_dtype=jnp.bfloat16))
    assert out_bf16.dtype == jnp.bfloat16
    assert jnp.allclose(out_bf16.astype(jnp.float32), ref2.T, atol=2e-2, rtol=2e-2), \
        "mismatch (gn, bf16)"

    # ng + bf16 + multi-block: row tile is rounded to 16 (bf16 sublane packing).
    out_ng_bf16 = jax.block_until_ready(
        gaussian_smearing(dist2, layout="ng", tile_n=264, out_dtype=jnp.bfloat16))
    assert out_ng_bf16.shape == (n2, 50), out_ng_bf16.shape
    assert jnp.allclose(out_ng_bf16.astype(jnp.float32), ref2, atol=2e-2, rtol=2e-2), \
        "mismatch (ng, bf16, ragged)"

    # Fused smearing + edge-embedding Linear (GATv2 lin_edge: 50 -> heads*out = 32).
    hidden = 32
    w = (jax.random.normal(k2, (50, hidden), dtype=jnp.float32) * 0.1)
    b = (jax.random.normal(k3, (hidden,), dtype=jnp.float32) * 0.1)
    fused = jax.block_until_ready(gaussian_smearing_edge_embed(dist2, w, b))
    ref_fused = (ref2 @ w + b).T
    assert fused.shape == (hidden, n2), fused.shape
    assert jnp.allclose(fused, ref_fused, atol=2e-2, rtol=2e-2), "mismatch (fused embed)"

    print("KERNEL_OK")
</pallas_src>

<mosaic_0001>
module attributes {stable_mosaic.version = 11 : i64} {
  func.func @_smear_kernel_gn(%arg0: i32, %arg1: memref<1x256xf32, #tpu.memory_space<vmem>>, %arg2: memref<50x256xf32, #tpu.memory_space<vmem>>) attributes {dimension_semantics = [#tpu.dimension_semantics<parallel>], iteration_bounds = array<i64: 1>, scalar_prefetch = 0 : i64, scratch_operands = 0 : i64, tpu.core_type = #tpu.core_type<tc>, window_params = [{transform_indices = @transform_0, window_bounds = array<i64: 1, 256>}, {transform_indices = @transform_1, window_bounds = array<i64: 50, 256>}]} {
    %0 = tpu.iota {dimensions = array<i32: 0>} : vector<50x1xi32>
    %1 = arith.sitofp %0 : vector<50x1xi32> to vector<50x1xf32>
    %cst = arith.constant 0.10204082 : f32
    %2 = vector.broadcast %cst : f32 to vector<50x1xf32>
    %3 = arith.mulf %2, %1 : vector<50x1xf32>
    %cst_0 = arith.constant 0.000000e+00 : f32
    %4 = vector.broadcast %cst_0 : f32 to vector<50x1xf32>
    %5 = arith.addf %4, %3 : vector<50x1xf32>
    %c0 = arith.constant 0 : index
    %c0_1 = arith.constant 0 : index
    %6 = vector.load %arg1[%c0, %c0_1] : memref<1x256xf32, #tpu.memory_space<vmem>>, vector<1x256xf32>
    %7 = vector.broadcast %6 : vector<1x256xf32> to vector<50x256xf32>
    %8 = vector.broadcast %5 : vector<50x1xf32> to vector<50x256xf32>
    %9 = arith.subf %7, %8 : vector<50x256xf32>
    %cst_2 = arith.constant -4.802000e+01 : f32
    %10 = vector.broadcast %cst_2 : f32 to vector<50x256xf32>
    %11 = arith.mulf %10, %9 : vector<50x256xf32>
    %12 = arith.mulf %11, %9 : vector<50x256xf32>
    %13 = math.exp %12 : vector<50x256xf32>
    %c0_3 = arith.constant 0 : index
    %c0_4 = arith.constant 0 : index
    %14 = vector.load %arg2[%c0_3, %c0_4] : memref<50x256xf32, #tpu.memory_space<vmem>>, vector<50x256xf32>
    tpu.vector_store %arg2[%c0_3, %c0_4], %13 {strides = array<i32>} : memref<50x256xf32, #tpu.memory_space<vmem>>, vector<50x256xf32>,
    return
  }
  func.func @transform_0(%arg0: i32) -> (i32, i32) {
    %c0_i32 = arith.constant 0 : i32
    %c0_i32_0 = arith.constant 0 : i32
    return %c0_i32, %arg0 : i32, i32
  }
  func.func @transform_1(%arg0: i32) -> (i32, i32) {
    %c0_i32 = arith.constant 0 : i32
    %c0_i32_0 = arith.constant 0 : i32
    return %c0_i32, %arg0 : i32, i32
  }
}

</mosaic_0001>

<llo_original>
// kernel: tpu_custom_call.1
$region0: #{tpu_custom_call.1}
  #allocation0 [shape = 'u32[]', space=smem, size = 0x4, offset = 0x4, fixed_abs, tag = 'smem constant byte address 0x4 - core index']
  #allocation1 [shape = 'u32[72,128]{1,0:T(1,128)}', space=vmem, size = 0x9000, scoped, tag = 'internal scratch']
  %s0 = inlined_call_operand.hbm [shape: f32[1,200], index: 0, kind: input, shape index: {}]
  %s1 = inlined_call_operand.hbm [shape: f32[50,200], index: 1, kind: output, shape index: {}]
  %s2 = sld [smem:[#allocation0]]
  $region18: #{tpu_custom_call.1} parent=0
    _
  %s4 = ssub.s32 1, %s2
  %s5 = scalar_select 0, %s4, %s2
  $region1: #{tpu_custom_call.1} parent=0
    #allocation2 [shape = 'u8[1024]{0}', space=vmem, size = 0x400, scoped, tag = 'input window, operand 0, single buffered']
    #allocation3 [shape = 's32[1]{0}', space=sflag, size = 0x4, scoped, tag = 'scoped memory for tpu_custom_call.1']
    #allocation4 [shape = 's32[1]{0}', space=sflag, size = 0x4, scoped, tag = 'scoped memory for tpu_custom_call.1']
    #allocation5 [shape = 'u8[57344]{0}', space=vmem, size = 0xe000, scoped, tag = 'output window, operand 0, single buffered']
    %6 = vsyncpa [#allocation3], 0
    %7 = vsyncpa [#allocation4], 0
    // Predicated region
    $region2: #{tpu_custom_call.1} parent=1 // pred_check
      _
    $region3: #{tpu_custom_call.1} parent=1 // pred_check_branch
      %9 = sbr.rel (0) target = $region5
    $region4: #{tpu_custom_call.1} parent=1 // pred_region
      %11 = vsyncadd [#allocation3], 0
      %s13 = sshll.u32 %s0, 4
      %s14 = int_to_ptr.hbm [resolvable:$true] %s13
      %s15 = sshll.u32 [#allocation2], 4
      %s16 = int_to_ptr.vmem [resolvable:$true] %s15
      %18 = dma.hbm_to_vmem [thread:$0]  %s14, 32, %s16, [#allocation3]
    $region5: #{tpu_custom_call.1} parent=1 // pred_fallthru
      _
    // Predicated region
    $region6: #{tpu_custom_call.1} parent=1 // pred_check
      _
    $region7: #{tpu_custom_call.1} parent=1 // pred_check_branch
      %20 = sbr.rel (0) target = $region9
    $region8: #{tpu_custom_call.1} parent=1 // pred_region
      %22 = dma.done [#allocation3], 32
    $region9: #{tpu_custom_call.1} parent=1 // pred_fallthru
      _
    %v23 = vlaneseq
    %v24 = vshrl.u32 %v23, 7
    %v25 = vadd.s32 %v24, 8
    %v26 = vadd.s32 %v24, 16
    %v27 = vadd.s32 %v24, 24
    %v28 = vadd.s32 %v24, 32
    %v29 = vadd.s32 %v24, 40
    %v30 = vadd.s32 %v24, 48
    %v31 = vcvt.s32.f32 %v24
    %v32 = vcvt.s32.f32 %v25
    %v33 = vcvt.s32.f32 %v26
    %v34 = vcvt.s32.f32 %v27
    %v35 = vcvt.s32.f32 %v28
    %v36 = vcvt.s32.f32 %v29
    %v37 = vcvt.s32.f32 %v30
    %v38 = vmul.f32 %v31, 0.10204082
    %v39 = vmul.f32 %v32, 0.10204082
    %v40 = vmul.f32 %v33, 0.10204082
    %v41 = vmul.f32 %v34, 0.10204082
    %v42 = vmul.f32 %v35, 0.10204082
    %v43 = vmul.f32 %v36, 0.10204082
    %v44 = vmul.f32 %v37, 0.10204082
    %v45 = vadd.f32 %v38, 0.0
    %v46 = vadd.f32 %v39, 0.0
    %v47 = vadd.f32 %v40, 0.0
    %v48 = vadd.f32 %v41, 0.0
    %v49 = vadd.f32 %v42, 0.0
    %v50 = vadd.f32 %v43, 0.0
    %v51 = vadd.f32 %v44, 0.0
    %v52 = vld [vmem:[#allocation2] sm:$0x3]
    %v54 = vperm.slane %v52, 0
    %v55 = vperm.slane %v52, 1
    %v58 = vsub.f32 %v54, %v45
    %v59 = vsub.f32 %v55, %v45
    %v60 = vsub.f32 %v54, %v46
    %v61 = vsub.f32 %v55, %v46
    %v62 = vsub.f32 %v54, %v47
    %v63 = vsub.f32 %v55, %v47
    %v64 = vsub.f32 %v54, %v48
    %v65 = vsub.f32 %v55, %v48
    %v66 = vsub.f32 %v54, %v49
    %v67 = vsub.f32 %v55, %v49
    %v68 = vsub.f32 %v54, %v50
    %v69 = vsub.f32 %v55, %v50
    %v70 = vsub.f32 %v54, %v51
    %v71 = vsub.f32 %v55, %v51
    %v72 = vmul.f32 %v58, -48.02
    %v73 = vmul.f32 %v59, -48.02
    %v74 = vmul.f32 %v60, -48.02
    %v75 = vmul.f32 %v61, -48.02
    %v76 = vmul.f32 %v62, -48.02
    %v77 = vmul.f32 %v63, -48.02
    %v78 = vmul.f32 %v64, -48.02
    %v79 = vmul.f32 %v65, -48.02
    %v80 = vmul.f32 %v66, -48.02
    %v81 = vmul.f32 %v67, -48.02
    %v82 = vmul.f32 %v68, -48.02
    %v83 = vmul.f32 %v69, -48.02
    %v84 = vmul.f32 %v70, -48.02
    %v85 = vmul.f32 %v71, -48.02
    %v86 = vmul.f32 %v72, %v58
    %v87 = vmul.f32 %v73, %v59
    %v88 = vmul.f32 %v74, %v60
    %v89 = vmul.f32 %v75, %v61
    %v90 = vmul.f32 %v76, %v62
    %v91 = vmul.f32 %v77, %v63
    %v92 = vmul.f32 %v78, %v64
    %v93 = vmul.f32 %v79, %v65
    %v94 = vmul.f32 %v80, %v66
    %v95 = vmul.f32 %v81, %v67
    %v96 = vmul.f32 %v82, %v68
    %v97 = vmul.f32 %v83, %v69
    %v98 = vmul.f32 %v84, %v70
    %v99 = vmul.f32 %v85, %v71
    %v100 = vmul.f32 %v86, 1.442695
    %v101 = vpow.pop %v100
    %v102 = vmul.f32 %v87, 1.442695
    %v103 = vpow.pop %v102
    %v104 = vmul.f32 %v88, 1.442695
    %v105 = vpow.pop %v104
    %v106 = vmul.f32 %v89, 1.442695
    %v107 = vpow.pop %v106
    %v108 = vmul.f32 %v90, 1.442695
    %v109 = vpow.pop %v108
    %v110 = vmul.f32 %v91, 1.442695
    %v111 = vpow.pop %v110
    %v112 = vmul.f32 %v92, 1.442695
    %v113 = vpow.pop %v112
    %v114 = vmul.f32 %v93, 1.442695
    %v115 = vpow.pop %v114
    %v116 = vmul.f32 %v94, 1.442695
    %v117 = vpow.pop %v116
    %v118 = vmul.f32 %v95, 1.442695
    %v119 = vpow.pop %v118
    %v120 = vmul.f32 %v96, 1.442695
    %v121 = vpow.pop %v120
    %v122 = vmul.f32 %v97, 1.442695
    %v123 = vpow.pop %v122
    %v124 = vmul.f32 %v98, 1.442695
    %v125 = vpow.pop %v124
    %v126 = vmul.f32 %v99, 1.442695
    %v127 = vpow.pop %v126
    %128 = vst [vmem:[#allocation5] sm:$0xff] %v101
    %129 = vst [vmem:[#allocation5 + $0x8] sm:$0xff] %v103
    %130 = vst [vmem:[#allocation5 + $0x10] sm:$0xff] %v105
    %131 = vst [vmem:[#allocation5 + $0x18] sm:$0xff] %v107
    %132 = vst [vmem:[#allocation5 + $0x20] sm:$0xff] %v109
    %133 = vst [vmem:[#allocation5 + $0x28] sm:$0xff] %v111
    %134 = vst [vmem:[#allocation5 + $0x30] sm:$0xff] %v113
    %135 = vst [vmem:[#allocation5 + $0x38] sm:$0xff] %v115
    %136 = vst [vmem:[#allocation5 + $0x40] sm:$0xff] %v117
    %137 = vst [vmem:[#allocation5 + $0x48] sm:$0xff] %v119
    %138 = vst [vmem:[#allocation5 + $0x50] sm:$0xff] %v121
    %139 = vst [vmem:[#allocation5 + $0x58] sm:$0xff] %v123
    %140 = vst [vmem:[#allocation5 + $0x60] sm:$0x3] %v125
    %141 = vst [vmem:[#allocation5 + $0x68] sm:$0x3] %v127
    // Predicated region
    $region10: #{tpu_custom_call.1} parent=1 // pred_check
      _
    $region11: #{tpu_custom_call.1} parent=1 // pred_check_branch
      %143 = sbr.rel (0) target = $region13
    $region12: #{tpu_custom_call.1} parent=1 // pred_region
      %145 = vsyncadd [#allocation4], 0
      %s146 = sshll.u32 [#allocation5], 4
      %s147 = int_to_ptr.vmem [resolvable:$true] %s146
      %s148 = sshll.u32 %s1, 4
      %s149 = int_to_ptr.hbm [resolvable:$true] %s148
      %154 = dma.vmem_to_hbm [thread:$0]  %s147, 1792, %s149, [#allocation4], 256, 256, 16
    $region13: #{tpu_custom_call.1} parent=1 // pred_fallthru
      _
    // Predicated region
    $region14: #{tpu_custom_call.1} parent=1 // pred_check
      _
    $region15: #{tpu_custom_call.1} parent=1 // pred_check_branch
      %156 = sbr.rel (0) target = $region17
    $region16: #{tpu_custom_call.1} parent=1 // pred_region
      %158 = dma.done [#allocation4], 1792
    $region17: #{tpu_custom_call.1} parent=1 // pred_fallthru
      _
    %159 = vsyncpa [#allocation3], 1
    %160 = vsyncpa [#allocation4], 1

</llo_original>
